<compile_context>
chip_gen: v7x
topology: tpu7x:2x2x1
jax: 0.10.0
libtpu: 0.0.40
codegen_flags: <defaults>
</compile_context>

<pallas_src>
import math
import numpy as np
import jax
import jax.numpy as jnp
from jax.experimental import pallas as pl
from jax.experimental.pallas import tpu as pltpu

LAYER_NORM_EPS = 1e-12
# Upper bound on scoped VMEM; safe on v5e/v6e (128 MiB physical) and v7x (64 MiB).
_VMEM_LIMIT_BYTES = 48 * 1024 * 1024


def _round_up(x, m):
    return ((x + m - 1) // m) * m


# ---------------------------------------------------------------------------
# Pallas kernels
# ---------------------------------------------------------------------------
def transform_kernel(x_ref, w_ref, b_ref, gamma_ref, beta_ref, o_ref):
    """dense(H->H) + erf-gelu + LayerNorm on one (tm, H) row tile.

    x: (tm, H) f32, w: (H, H) bf16 (= W^T, resident), b/gamma/beta: (1, H) f32.
    """
    x = x_ref[...]
    h = jnp.dot(x.astype(jnp.bfloat16), w_ref[...],
                preferred_element_type=jnp.float32) + b_ref[...]
    # gelu(x) = 0.5 * x * (erf(x / sqrt(2)) + 1)
    h = 0.5 * h * (jax.lax.erf(h * (1.0 / math.sqrt(2.0))) + 1.0)
    # LayerNorm over last axis (biased variance, like torch.nn.LayerNorm)
    mu = jnp.mean(h, axis=-1, keepdims=True)
    var = jnp.mean((h - mu) * (h - mu), axis=-1, keepdims=True)
    hn = (h - mu) * jax.lax.rsqrt(var + LAYER_NORM_EPS)
    o_ref[...] = (hn * gamma_ref[...] + beta_ref[...]).astype(o_ref.dtype)


def decoder_kernel(l_ref, r_ref, wt_ref, wb_ref, o_ref):
    """Concat-free decoder tile: out = left @ W_top + right @ W_bot.

    l/r: (tm, H) f32, wt/wb: (H, tn) bf16, out: (tm, tn) f32.
    """
    acc = jnp.dot(l_ref[...].astype(jnp.bfloat16), wt_ref[...],
                  preferred_element_type=jnp.float32)
    acc = acc + jnp.dot(r_ref[...].astype(jnp.bfloat16), wb_ref[...],
                        preferred_element_type=jnp.float32)
    o_ref[...] = acc.astype(o_ref.dtype)


# ---------------------------------------------------------------------------
# Wrappers
# ---------------------------------------------------------------------------
def transform_pallas(x2d, w_t_bf16, b, gamma, beta, tm):
    M, H = x2d.shape
    return pl.pallas_call(
        transform_kernel,
        out_shape=jax.ShapeDtypeStruct((M, H), jnp.float32),
        grid=(M // tm,),
        in_specs=[
            pl.BlockSpec((tm, H), lambda i: (i, 0)),   # row tile
            pl.BlockSpec((H, H), lambda i: (0, 0)),    # weight, resident
            pl.BlockSpec((1, H), lambda i: (0, 0)),    # bias
            pl.BlockSpec((1, H), lambda i: (0, 0)),    # gamma
            pl.BlockSpec((1, H), lambda i: (0, 0)),    # beta
        ],
        out_specs=pl.BlockSpec((tm, H), lambda i: (i, 0)),
        compiler_params=pltpu.CompilerParams(
            dimension_semantics=("parallel",),
            vmem_limit_bytes=_VMEM_LIMIT_BYTES),
    )(x2d, w_t_bf16, b, gamma, beta)


def decoder_pallas(left, right, w_top_bf16, w_bot_bf16, tm, tn):
    N, H = left.shape
    V = w_top_bf16.shape[1]
    cost = pl.CostEstimate(
        flops=2 * N * (2 * H) * V,
        transcendentals=0,
        bytes_accessed=(left.size + right.size + N * V) * 4
        + (w_top_bf16.size + w_bot_bf16.size) * 2,
    )
    return pl.pallas_call(
        decoder_kernel,
        out_shape=jax.ShapeDtypeStruct((N, V), jnp.float32),
        grid=(N // tm, V // tn),
        in_specs=[
            pl.BlockSpec((tm, H), lambda i, j: (i, 0)),   # left rows
            pl.BlockSpec((tm, H), lambda i, j: (i, 0)),   # right rows
            pl.BlockSpec((H, tn), lambda i, j: (0, j)),   # W_top column tile
            pl.BlockSpec((H, tn), lambda i, j: (0, j)),   # W_bot column tile
        ],
        out_specs=pl.BlockSpec((tm, tn), lambda i, j: (i, j)),
        compiler_params=pltpu.CompilerParams(
            dimension_semantics=("parallel", "parallel"),
            vmem_limit_bytes=_VMEM_LIMIT_BYTES),
        cost_estimate=cost,
    )(left, right, w_top_bf16, w_bot_bf16)


def sbo_prediction_head(hidden_states, mlm_labels, params):
    """Forward pass of SBOPredictionHead.

    hidden_states: (B, S, H) float32
    mlm_labels:    (B, S)   int32
    returns        (N, V)   float32 where N = number of positions with label>0
    """
    B, S, H = hidden_states.shape
    M = B * S

    # --- transform: dense + gelu + LayerNorm (Pallas, row-tiled) ---
    tm_t = min(256, _round_up(M, 8))
    M_pad = _round_up(M, tm_t)
    x2d = hidden_states.reshape(M, H)
    if M_pad != M:
        x2d = jnp.pad(x2d, ((0, M_pad - M), (0, 0)))

    dense_w_bf16 = params["dense_w_t"].astype(jnp.bfloat16)
    h2d = transform_pallas(x2d, dense_w_bf16, params["dense_b"],
                           params["ln_gamma"], params["ln_beta"], tm_t)

    # --- label rolling + masked-row gather (device-side) ---
    labels = mlm_labels
    left_labels = jnp.concatenate([labels[:, 1:], labels[:, :1]], -1).reshape(-1)
    right_labels = jnp.concatenate([labels[:, -1:], labels[:, :-1]], -1).reshape(-1)

    # The module's output shape is data-dependent, so one scalar readback of N.
    # left/right counts are equal (both are rolls of the same label array).
    N = int(jnp.sum(left_labels > 0))
    # TODO(synk): a fully-jittable variant needs a caller-provided static N_max;
    # here N is read back once solely to preserve the (N, V) output shape.

    tm_d = min(256, _round_up(max(N, 1), 8))
    N_pad = _round_up(max(N, 1), tm_d)
    li = jnp.nonzero(left_labels > 0, size=N_pad, fill_value=0)[0]
    ri = jnp.nonzero(right_labels > 0, size=N_pad, fill_value=0)[0]
    left_rows = jnp.take(h2d, li, axis=0)    # (N_pad, H)
    right_rows = jnp.take(h2d, ri, axis=0)   # (N_pad, H)

    # --- decoder: concat-free, split weight (Pallas, 2-D tiled) ---
    w = params["decoder_w_t"]                 # (2H, V) == W^T
    V = w.shape[1]
    tn = min(512, _round_up(V, 128))
    V_pad = _round_up(V, tn)
    w_top = w[:H].astype(jnp.bfloat16)
    w_bot = w[H:].astype(jnp.bfloat16)
    if V_pad != V:
        w_top = jnp.pad(w_top, ((0, 0), (0, V_pad - V)))
        w_bot = jnp.pad(w_bot, ((0, 0), (0, V_pad - V)))

    logits = decoder_pallas(left_rows, right_rows, w_top, w_bot, tm_d, tn)
    return logits[:N, :V]


# ---------------------------------------------------------------------------
# Pure-JAX f32 reference (for sanity check)
# ---------------------------------------------------------------------------
def sbo_reference(hidden_states, mlm_labels, params):
    B, S, H = hidden_states.shape
    x2d = hidden_states.reshape(B * S, H)
    h = x2d @ params["dense_w_t"] + params["dense_b"]
    h = 0.5 * h * (jax.scipy.special.erf(h / jnp.sqrt(2.0)) + 1.0)
    mu = jnp.mean(h, axis=-1, keepdims=True)
    var = jnp.mean((h - mu) ** 2, axis=-1, keepdims=True)
    h = (h - mu) / jnp.sqrt(var + LAYER_NORM_EPS)
    h = h * params["ln_gamma"] + params["ln_beta"]

    labels = np.asarray(mlm_labels)
    left = np.concatenate([labels[:, 1:], labels[:, :1]], axis=-1).reshape(-1)
    right = np.concatenate([labels[:, -1:], labels[:, :-1]], axis=-1).reshape(-1)
    li = np.nonzero(left > 0)[0]
    ri = np.nonzero(right > 0)[0]
    sbo = jnp.concatenate([h[li], h[ri]], axis=-1)
    return sbo @ params["decoder_w_t"]


# ---------------------------------------------------------------------------
if __name__ == "__main__":
    B, S, H, V = 2, 8, 32, 64

    key = jax.random.PRNGKey(0)
    k_x, k_lbl, k_w, k_b, k_g, k_bt, k_d = jax.random.split(key, 7)

    hidden_states = jax.random.normal(k_x, (B, S, H), dtype=jnp.float32)
    # labels in [0, 5): ~80% of positions are "span" positions (> 0)
    mlm_labels = jax.random.randint(k_lbl, (B, S), 0, 5, dtype=jnp.int32)

    params = {
        # nn.Linear(H, H): weight (H_out, H_in); we store its transpose (H_in, H_out)
        "dense_w_t": (jax.random.normal(k_w, (H, H), jnp.float32) * 0.05),
        "dense_b": (jax.random.normal(k_b, (1, H), jnp.float32) * 0.05),
        "ln_gamma": 1.0 + 0.1 * jax.random.normal(k_g, (1, H), jnp.float32),
        "ln_beta": 0.1 * jax.random.normal(k_bt, (1, H), jnp.float32),
        # nn.Linear(2H, V, bias=False): weight (V, 2H); store transpose (2H, V)
        "decoder_w_t": (jax.random.normal(k_d, (2 * H, V), jnp.float32) * 0.05),
    }

    out = sbo_prediction_head(hidden_states, mlm_labels, params)
    out = jax.block_until_ready(out)

    ref = sbo_reference(hidden_states, mlm_labels, params)
    # bf16 MXU operands with f32 accumulation -> relax tolerance vs pure-f32 ref
    np.testing.assert_allclose(np.asarray(out), np.asarray(ref), rtol=2e-2, atol=2e-2)

    print("KERNEL_OK")
</pallas_src>

<mosaic_0001>
module attributes {stable_mosaic.version = 11 : i64} {
  func.func @transform_kernel(%arg0: i32, %arg1: memref<16x32xf32, #tpu.memory_space<vmem>>, %arg2: memref<32x32xbf16, #tpu.memory_space<vmem>>, %arg3: memref<1x32xf32, #tpu.memory_space<vmem>>, %arg4: memref<1x32xf32, #tpu.memory_space<vmem>>, %arg5: memref<1x32xf32, #tpu.memory_space<vmem>>, %arg6: memref<16x32xf32, #tpu.memory_space<vmem>>) attributes {dimension_semantics = [#tpu.dimension_semantics<parallel>], iteration_bounds = array<i64: 1>, scalar_prefetch = 0 : i64, scratch_operands = 0 : i64, tpu.core_type = #tpu.core_type<tc>, window_params = [{transform_indices = @transform_0, window_bounds = array<i64: 16, 32>}, {pipeline_mode = #tpu.pipeline_mode<synchronous>, transform_indices = @transform_1, window_bounds = array<i64: 32, 32>}, {pipeline_mode = #tpu.pipeline_mode<synchronous>, transform_indices = @transform_2, window_bounds = array<i64: 1, 32>}, {pipeline_mode = #tpu.pipeline_mode<synchronous>, transform_indices = @transform_3, window_bounds = array<i64: 1, 32>}, {pipeline_mode = #tpu.pipeline_mode<synchronous>, transform_indices = @transform_4, window_bounds = array<i64: 1, 32>}, {transform_indices = @transform_5, window_bounds = array<i64: 16, 32>}]} {
    %c0 = arith.constant 0 : index
    %c0_0 = arith.constant 0 : index
    %0 = vector.load %arg1[%c0, %c0_0] : memref<16x32xf32, #tpu.memory_space<vmem>>, vector<16x32xf32>
    %1 = arith.truncf %0 : vector<16x32xf32> to vector<16x32xbf16>
    %c0_1 = arith.constant 0 : index
    %c0_2 = arith.constant 0 : index
    %2 = vector.load %arg2[%c0_1, %c0_2] : memref<32x32xbf16, #tpu.memory_space<vmem>>, vector<32x32xbf16>
    %cst = arith.constant dense<0.000000e+00> : vector<16x32xf32>
    %3 = tpu.matmul %1, %2, %cst {dimension_numbers = #tpu.dot_dimension_numbers<[1], [0], [0], [1], [0, 0, 1, 1], [], []>} : vector<16x32xbf16>, vector<32x32xbf16>, vector<16x32xf32> -> vector<16x32xf32>
    %c0_3 = arith.constant 0 : index
    %c0_4 = arith.constant 0 : index
    %4 = vector.load %arg3[%c0_3, %c0_4] : memref<1x32xf32, #tpu.memory_space<vmem>>, vector<1x32xf32>
    %5 = vector.broadcast %4 : vector<1x32xf32> to vector<16x32xf32>
    %6 = arith.addf %3, %5 : vector<16x32xf32>
    %cst_5 = arith.constant 5.000000e-01 : f32
    %7 = vector.broadcast %cst_5 : f32 to vector<16x32xf32>
    %8 = arith.mulf %7, %6 : vector<16x32xf32>
    %cst_6 = arith.constant 0.707106769 : f32
    %9 = vector.broadcast %cst_6 : f32 to vector<16x32xf32>
    %10 = arith.mulf %6, %9 : vector<16x32xf32>
    %11 = math.erf %10 : vector<16x32xf32>
    %cst_7 = arith.constant 1.000000e+00 : f32
    %12 = vector.broadcast %cst_7 : f32 to vector<16x32xf32>
    %13 = arith.addf %11, %12 : vector<16x32xf32>
    %14 = arith.mulf %8, %13 : vector<16x32xf32>
    %cst_8 = arith.constant dense<0.000000e+00> : vector<16xf32>
    %15 = vector.multi_reduction <add>, %14, %cst_8 [1] : vector<16x32xf32> to vector<16xf32>
    %16 = vector.shape_cast %15 : vector<16xf32> to vector<16x1xf32>
    %cst_9 = arith.constant 3.200000e+01 : f32
    %17 = vector.broadcast %cst_9 : f32 to vector<16x1xf32>
    %18 = arith.divf %16, %17 : vector<16x1xf32>
    %19 = vector.broadcast %18 : vector<16x1xf32> to vector<16x32xf32>
    %20 = arith.subf %14, %19 : vector<16x32xf32>
    %21 = vector.broadcast %18 : vector<16x1xf32> to vector<16x32xf32>
    %22 = arith.subf %14, %21 : vector<16x32xf32>
    %23 = arith.mulf %20, %22 : vector<16x32xf32>
    %cst_10 = arith.constant dense<0.000000e+00> : vector<16xf32>
    %24 = vector.multi_reduction <add>, %23, %cst_10 [1] : vector<16x32xf32> to vector<16xf32>
    %25 = vector.shape_cast %24 : vector<16xf32> to vector<16x1xf32>
    %cst_11 = arith.constant 3.200000e+01 : f32
    %26 = vector.broadcast %cst_11 : f32 to vector<16x1xf32>
    %27 = arith.divf %25, %26 : vector<16x1xf32>
    %28 = vector.broadcast %18 : vector<16x1xf32> to vector<16x32xf32>
    %29 = arith.subf %14, %28 : vector<16x32xf32>
    %cst_12 = arith.constant 9.99999996E-13 : f32
    %30 = vector.broadcast %cst_12 : f32 to vector<16x1xf32>
    %31 = arith.addf %27, %30 : vector<16x1xf32>
    %32 = math.rsqrt %31 : vector<16x1xf32>
    %33 = vector.broadcast %32 : vector<16x1xf32> to vector<16x32xf32>
    %34 = arith.mulf %29, %33 : vector<16x32xf32>
    %c0_13 = arith.constant 0 : index
    %c0_14 = arith.constant 0 : index
    %35 = vector.load %arg4[%c0_13, %c0_14] : memref<1x32xf32, #tpu.memory_space<vmem>>, vector<1x32xf32>
    %36 = vector.broadcast %35 : vector<1x32xf32> to vector<16x32xf32>
    %37 = arith.mulf %34, %36 : vector<16x32xf32>
    %c0_15 = arith.constant 0 : index
    %c0_16 = arith.constant 0 : index
    %38 = vector.load %arg5[%c0_15, %c0_16] : memref<1x32xf32, #tpu.memory_space<vmem>>, vector<1x32xf32>
    %39 = vector.broadcast %38 : vector<1x32xf32> to vector<16x32xf32>
    %40 = arith.addf %37, %39 : vector<16x32xf32>
    %c0_17 = arith.constant 0 : index
    %c0_18 = arith.constant 0 : index
    %41 = vector.load %arg6[%c0_17, %c0_18] : memref<16x32xf32, #tpu.memory_space<vmem>>, vector<16x32xf32>
    tpu.vector_store %arg6[%c0_17, %c0_18], %40 {strides = array<i32>} : memref<16x32xf32, #tpu.memory_space<vmem>>, vector<16x32xf32>,
    return
  }
  func.func @transform_0(%arg0: i32) -> (i32, i32) {
    %c0_i32 = arith.constant 0 : i32
    %c0_i32_0 = arith.constant 0 : i32
    return %arg0, %c0_i32 : i32, i32
  }
  func.func @transform_1(%arg0: i32) -> (i32, i32) {
    %c0_i32 = arith.constant 0 : i32
    %c0_i32_0 = arith.constant 0 : i32
    %c0_i32_1 = arith.constant 0 : i32
    return %c0_i32, %c0_i32_0 : i32, i32
  }
  func.func @transform_2(%arg0: i32) -> (i32, i32) {
    %c0_i32 = arith.constant 0 : i32
    %c0_i32_0 = arith.constant 0 : i32
    %c0_i32_1 = arith.constant 0 : i32
    return %c0_i32, %c0_i32_0 : i32, i32
  }
  func.func @transform_3(%arg0: i32) -> (i32, i32) {
    %c0_i32 = arith.constant 0 : i32
    %c0_i32_0 = arith.constant 0 : i32
    %c0_i32_1 = arith.constant 0 : i32
    return %c0_i32, %c0_i32_0 : i32, i32
  }
  func.func @transform_4(%arg0: i32) -> (i32, i32) {
    %c0_i32 = arith.constant 0 : i32
    %c0_i32_0 = arith.constant 0 : i32
    %c0_i32_1 = arith.constant 0 : i32
    return %c0_i32, %c0_i32_0 : i32, i32
  }
  func.func @transform_5(%arg0: i32) -> (i32, i32) {
    %c0_i32 = arith.constant 0 : i32
    %c0_i32_0 = arith.constant 0 : i32
    return %arg0, %c0_i32 : i32, i32
  }
}

</mosaic_0001>

<llo_original>
// kernel: tpu_custom_call.1
$region0: #{tpu_custom_call.1}
  #allocation0 [shape = 'u32[]', space=smem, size = 0x4, offset = 0x4, fixed_abs, tag = 'smem constant byte address 0x4 - core index']
  #allocation1 [shape = 'u32[144,128]{1,0:T(1,128)}', space=vmem, size = 0x12000, scoped, tag = 'internal scratch']
  %s0 = inlined_call_operand.hbm [shape: f32[16,32], index: 0, kind: input, shape index: {}]
  %s1 = inlined_call_operand.hbm [shape: bf16[32,32], index: 1, kind: input, shape index: {}]
  %s2 = inlined_call_operand.vmem [shape: f32[1,32], index: 2, kind: input, shape index: {}]
  %s3 = inlined_call_operand.vmem [shape: f32[1,32], index: 3, kind: input, shape index: {}]
  %s4 = inlined_call_operand.vmem [shape: f32[1,32], index: 4, kind: input, shape index: {}]
  %s5 = inlined_call_operand.hbm [shape: f32[16,32], index: 5, kind: output, shape index: {}]
  %s6 = sld [smem:[#allocation0]]
  $region38: #{tpu_custom_call.1} parent=0
    _
  %s8 = ssub.s32 1, %s6
  %s9 = scalar_select 0, %s8, %s6
  $region1: #{tpu_custom_call.1} parent=0
    #allocation2 [shape = 'u8[8192]{0}', space=vmem, size = 0x2000, scoped, tag = 'input window, operand 0, single buffered']
    #allocation3 [shape = 's32[1]{0}', space=sflag, size = 0x4, scoped, tag = 'scoped memory for tpu_custom_call.1']
    #allocation4 [shape = 's32[1]{0}', space=sflag, size = 0x4, scoped, tag = 'scoped memory for tpu_custom_call.1']
    #allocation5 [shape = 'u8[8192]{0}', space=vmem, size = 0x2000, scoped, tag = 'input window, operand 1, single buffered']
    #allocation6 [shape = 's32[1]{0}', space=sflag, size = 0x4, scoped, tag = 'scoped memory for tpu_custom_call.1']
    #allocation7 [shape = 'u8[8192]{0}', space=vmem, size = 0x2000, scoped, tag = 'output window, operand 0, single buffered']
    %10 = vsyncpa [#allocation3], 0
    %11 = vsyncpa [#allocation6], 0
    %12 = vsyncpa [#allocation4], 0
    // Predicated region
    $region2: #{tpu_custom_call.1} parent=1 // pred_check
      _
    $region3: #{tpu_custom_call.1} parent=1 // pred_check_branch
      %14 = sbr.rel (0) target = $region5
    $region4: #{tpu_custom_call.1} parent=1 // pred_region
      %s16 = ssub.s32 256, 256
      %17 = vsyncadd [#allocation3], %s16
      %s18 = sshll.u32 [#allocation2], 4
      %s19 = int_to_ptr.vmem [resolvable:$true] %s18
      %24 = dma.hbm_to_vmem [thread:$0]  %s0, 256, %s19, [#allocation3], 128, 128, 8
    $region5: #{tpu_custom_call.1} parent=1 // pred_fallthru
      _
    // Predicated region
    $region6: #{tpu_custom_call.1} parent=1 // pred_check
      _
    $region7: #{tpu_custom_call.1} parent=1 // pred_check_branch
      %26 = sbr.rel (0) target = $region9
    $region8: #{tpu_custom_call.1} parent=1 // pred_region
      %s28 = ssub.s32 256, 256
      %29 = vsyncadd [#allocation6], %s28
      %s30 = sshll.u32 [#allocation5], 4
      %s31 = int_to_ptr.vmem [resolvable:$true] %s30
      %36 = dma.hbm_to_vmem [thread:$0]  %s1, 256, %s31, [#allocation6], 64, 64, 4
    $region9: #{tpu_custom_call.1} parent=1 // pred_fallthru
      _
    // Predicated region
    $region10: #{tpu_custom_call.1} parent=1 // pred_check
      _
    $region11: #{tpu_custom_call.1} parent=1 // pred_check_branch
      %38 = sbr.rel (0) target = $region13
    $region12: #{tpu_custom_call.1} parent=1 // pred_region
      _
    $region13: #{tpu_custom_call.1} parent=1 // pred_fallthru
      _
    // Predicated region
    $region14: #{tpu_custom_call.1} parent=1 // pred_check
      _
    $region15: #{tpu_custom_call.1} parent=1 // pred_check_branch
      %40 = sbr.rel (0) target = $region17
    $region16: #{tpu_custom_call.1} parent=1 // pred_region
      _
    $region17: #{tpu_custom_call.1} parent=1 // pred_fallthru
      _
    // Predicated region
    $region18: #{tpu_custom_call.1} parent=1 // pred_check
      _
    $region19: #{tpu_custom_call.1} parent=1 // pred_check_branch
      %42 = sbr.rel (0) target = $region21
    $region20: #{tpu_custom_call.1} parent=1 // pred_region
      _
    $region21: #{tpu_custom_call.1} parent=1 // pred_fallthru
      _
    // Predicated region
    $region22: #{tpu_custom_call.1} parent=1 // pred_check
      _
    $region23: #{tpu_custom_call.1} parent=1 // pred_check_branch
      %44 = sbr.rel (0) target = $region25
    $region24: #{tpu_custom_call.1} parent=1 // pred_region
      %45 = dma.done [#allocation3], 256
    $region25: #{tpu_custom_call.1} parent=1 // pred_fallthru
      _
    // Predicated region
    $region26: #{tpu_custom_call.1} parent=1 // pred_check
      _
    $region27: #{tpu_custom_call.1} parent=1 // pred_check_branch
      %47 = sbr.rel (0) target = $region29
    $region28: #{tpu_custom_call.1} parent=1 // pred_region
      %48 = dma.done [#allocation6], 256
    $region29: #{tpu_custom_call.1} parent=1 // pred_fallthru
      _
    %v50 = vld [vmem:[#allocation2] sm:$0xff]
    %v51 = vld [vmem:[#allocation2 + $0x8] sm:$0xff]
    %v52 = vpack.c.bf16 %v51, %v50
    %v53 = vld [vmem:[#allocation5] sm:$0xf]
    %v54 = vld [vmem:[#allocation5 + $0x4] sm:$0xf]
    %v55 = vld [vmem:[#allocation5 + $0x8] sm:$0xf]
    %v56 = vld [vmem:[#allocation5 + $0xc] sm:$0xf]
    %v57 = vld [vmem:[%s2] sm:$0x1]
    %v59 = vlaneseq
    %v60 = vshrl.u32 %v59, 7
    %v61 = vsub.s32 0, %v60
    %v62 = vrot.slane %v57, %v61
    %v68 = vunpack.c.l.b16 %v53
    %v69 = vunpack.c.l.b16 %v54
    %v70 = vunpack.c.l.b16 %v55
    %v71 = vunpack.c.l.b16 %v56
    %v72 = vpack.c.b16 %v69, %v68
    %v73 = vpack.c.b16 %v71, %v70
    %vm76 = vcmask 261120
    %v78 = vsel %vm76, %v52, 0
    %80 = vmatprep.subr.bf16.mxu0 0
    %81 = vmatpush1.bf16.msra.mxu0 %v72
    %82 = vmatprep.subr.bf16.mxu0 0
    %83 = vmatpush1.bf16.msra.mxu0 %v73
    %84 = vmatprep.subr.bf16.mxu0 0
    %85 = vmatpush1.bf16.msra.mxu0 0
    %86 = vmatprep.subr.bf16.mxu0 0
    %87 = vmatpush1.bf16.msra.mxu0 0
    %88 = vmatprep.subr.bf16.mxu0 0
    %89 = vmatpush1.bf16.msra.mxu0 0
    %90 = vmatprep.subr.bf16.mxu0 0
    %91 = vmatpush1.bf16.msra.mxu0 0
    %92 = vmatprep.subr.bf16.mxu0 0
    %93 = vmatpush1.bf16.msra.mxu0 0
    %94 = vmatprep.subr.bf16.mxu0 0
    %95 = vmatpush1.bf16.msra.mxu0 0
    %96 = vmatprep.subr.bf16.mxu0 0
    %97 = vmatpush1.bf16.msra.mxu0 0
    %98 = vmatprep.subr.bf16.mxu0 0
    %99 = vmatpush1.bf16.msra.mxu0 0
    %100 = vmatprep.subr.bf16.mxu0 0
    %101 = vmatpush1.bf16.msra.mxu0 0
    %102 = vmatprep.subr.bf16.mxu0 0
    %103 = vmatpush1.bf16.msra.mxu0 0
    %104 = vmatprep.subr.bf16.mxu0 0
    %105 = vmatpush1.bf16.msra.mxu0 0
    %106 = vmatprep.subr.bf16.mxu0 0
    %107 = vmatpush1.bf16.msra.mxu0 0
    %108 = vmatprep.subr.bf16.mxu0 0
    %109 = vmatpush1.bf16.msra.mxu0 0
    %110 = vmatprep.subr.bf16.mxu0 0
    %111 = vmatpush1.bf16.msra.mxu0 0
    %112 = vmatprep.mubr.bf16.mxu0 0
    %113 = vmatmul.mubr.bf16.gmra.mrb[0].mxu0 %v78
    %v114 = vpop.f32.mrb[0].mxu0
    %v115 = vadd.f32 %v62, %v114
    %v116 = vpop.f32.mrb[0].mxu0
    %v117 = vpop.f32.mrb[0].mxu0
    %v118 = vadd.f32 %v62, %v117
    %v119 = vpop.f32.mrb[0].mxu0
    %120 = vdwg.mxu0
    %v121 = vmul.f32 %v115, 0.5
    %v122 = vmul.f32 %v118, 0.5
    %v123 = vmul.f32 %v115, 0.70710677
    %v124 = vmul.f32 %v118, 0.70710677
    %v125 = verf.f32.pop %v123
    %v126 = verf.f32.pop %v124
    %v127 = vadd.f32 %v125, 1.0
    %v128 = vadd.f32 %v126, 1.0
    %v129 = vmul.f32 %v121, %v127
    %v130 = vmul.f32 %v122, %v128
    %v131 = vsel %vm76, %v129, 0.0
    %132 = vadd.xlane.f32.xlu0 %v131
    %v133 = vpop.xlane.xlu0 %132
    %v134 = vsel %vm76, %v130, 0.0
    %135 = vadd.xlane.f32.xlu0 %v134
    %v136 = vpop.xlane.xlu0 %135
    %v137 = vrcp.pop 32.0
    %v138 = vmul.f32 %v133, %v137
    %v139 = vmul.f32 %v136, %v137
    %v140 = vsub.f32 %v129, %v138
    %v141 = vsub.f32 %v130, %v139
    %v142 = vmul.f32 %v140, %v140
    %v143 = vmul.f32 %v141, %v141
    %v144 = vsel %vm76, %v142, 0.0
    %145 = vadd.xlane.f32.xlu0 %v144
    %v146 = vpop.xlane.xlu0 %145
    %v147 = vsel %vm76, %v143, 0.0
    %148 = vadd.xlane.f32.xlu0 %v147
    %v149 = vpop.xlane.xlu0 %148
    %v150 = vmul.f32 %v146, %v137
    %v151 = vmul.f32 %v149, %v137
    %v152 = vadd.f32 %v150, 1e-12
    %v153 = vadd.f32 %v151, 1e-12
    %v154 = vrsqrt.pop %v152
    %v155 = vrsqrt.pop %v153
    %v156 = vmul.f32 %v140, %v154
    %v157 = vmul.f32 %v141, %v155
    %v158 = vld [vmem:[%s3] sm:$0x1]
    %v160 = vlaneseq
    %v161 = vshrl.u32 %v160, 7
    %v162 = vsub.s32 0, %v161
    %v163 = vrot.slane %v158, %v162
    %v165 = vmul.f32 %v156, %v163
    %v166 = vmul.f32 %v157, %v163
    %v167 = vld [vmem:[%s4] sm:$0x1]
    %v169 = vlaneseq
    %v170 = vshrl.u32 %v169, 7
    %v171 = vsub.s32 0, %v170
    %v172 = vrot.slane %v167, %v171
    %v174 = vadd.f32 %v165, %v172
    %v175 = vadd.f32 %v166, %v172
    %176 = vst.msk [vmem:[#allocation7] sm:$0xff] %vm76, %v174
    %177 = vst.msk [vmem:[#allocation7 + $0x8] sm:$0xff] %vm76, %v175
    // Predicated region
    $region30: #{tpu_custom_call.1} parent=1 // pred_check
      _
    $region31: #{tpu_custom_call.1} parent=1 // pred_check_branch
      %179 = sbr.rel (0) target = $region33
    $region32: #{tpu_custom_call.1} parent=1 // pred_region
      %s181 = ssub.s32 256, 256
      %182 = vsyncadd [#allocation4], %s181
      %s183 = sshll.u32 [#allocation7], 4
      %s184 = int_to_ptr.vmem [resolvable:$true] %s183
      %189 = dma.vmem_to_hbm [thread:$0]  %s184, 256, %s5, [#allocation4], 128, 128, 8
    $region33: #{tpu_custom_call.1} parent=1 // pred_fallthru
      _
    // Predicated region
    $region34: #{tpu_custom_call.1} parent=1 // pred_check
      _
    $region35: #{tpu_custom_call.1} parent=1 // pred_check_branch
      %191 = sbr.rel (0) target = $region37
    $region36: #{tpu_custom_call.1} parent=1 // pred_region
      %192 = dma.done [#allocation4], 256
    $region37: #{tpu_custom_call.1} parent=1 // pred_fallthru
      _
    %193 = vsyncpa [#allocation3], 1
    %194 = vsyncpa [#allocation6], 1
    %195 = vsyncpa [#allocation4], 1

</llo_original>
